<compile_context>
chip_gen: v6e
topology: v6e:2x2x1
jax: 0.10.0
libtpu: 0.0.40
codegen_flags: <defaults>
</compile_context>

<pallas_src>
import numpy as np
import jax
import jax.numpy as jnp
from jax.experimental import pallas as pl
from jax.experimental.pallas import tpu as pltpu

KPAD = 128                      # lanes per logical coordinate block
NZ_PAD = 128                    # contraction (feature) dim padded to one MXU K-pass
N_COORD = 3
W_PRED = N_COORD * KPAD         # 384 : pred_v slab (coordinate-major, 128-padded)
W_SYM = N_COORD * KPAD          # 384 : folded ensym slab
W_CAM = KPAD                    # 128 : scale|trans|quat|zero-pad
W_TOTAL = W_PRED + W_SYM + W_CAM  # 896 = 7 x 128 (every slice lane-aligned)


# --------------------------------------------------------------------------
# Fused kernel: one matmul emits pred slab, sym slab and cam block
# --------------------------------------------------------------------------
def _imm3d_fused_kernel(feat_ref, w_ref, b_ref, pred_ref, sym_ref, cam_ref):
    # Single fused MXU matmul for all heads + folded ensym (bf16 x bf16 -> f32).
    feat = feat_ref[...].astype(jnp.bfloat16)
    out = jnp.dot(feat, w_ref[...],
                  preferred_element_type=jnp.float32) + b_ref[...]   # (T, 896)

    # pred_v slab: bias already carries mean_v, so this IS mean_v + delta_v.
    pred_ref[...] = out[:, :W_PRED]

    # coordEnsymmicer slab: permutation, flip and mean_v all folded into (W, b).
    sym_ref[...] = out[:, W_PRED:W_PRED + W_SYM]

    # cam block: lane 0 scale, lanes 1..2 trans, lanes 3..6 quat, rest zero.
    cam = out[:, W_PRED + W_SYM:]
    col = jax.lax.broadcasted_iota(jnp.int32, cam.shape, 1)
    # ScalePredictor: relu(linear + 1) + 1e-12   (the +1 is folded into bias)
    scale_val = jnp.maximum(cam, 0.0) + 1e-12
    # QuatPredictor: torch F.normalize (eps = 1e-12) over lanes 3..6
    quat_mask = (col >= 3) & (col < 7)
    sumsq = jnp.sum(jnp.where(quat_mask, cam * cam, 0.0), axis=1, keepdims=True)
    inv_norm = jnp.minimum(jax.lax.rsqrt(sumsq), 1e12)   # == 1 / max(||q||, 1e-12)
    quat_val = cam * inv_norm
    cam_ref[...] = jnp.where(col == 0, scale_val,
                             jnp.where(quat_mask, quat_val, cam))


def imm3d_heads(feat, w_all, b_all, mean_v, n_kp, *, max_b_tile=256):
    """Runs the fused kernel and unpacks the lane-dense slabs."""
    B, nz = feat.shape
    # Pad batch to a multiple of 8 (full-sublane stores) and choose a batch
    # tile that keeps 2x double-buffered tiles well under every chip's VMEM.
    b_pad = max(8, -(-B // 8) * 8)
    tile = min(max_b_tile, b_pad)
    b_pad = -(-b_pad // tile) * tile
    feat_p = jnp.zeros((b_pad, NZ_PAD), jnp.float32).at[:B, :nz].set(feat)

    grid = (b_pad // tile,)
    out_shapes = (
        jax.ShapeDtypeStruct((b_pad, W_PRED), jnp.float32),   # pred_v slab
        jax.ShapeDtypeStruct((b_pad, W_SYM), jnp.float32),    # ensym slab
        jax.ShapeDtypeStruct((b_pad, W_CAM), jnp.float32),    # cam slab
    )
    pred_s, sym_s, cam_s = pl.pallas_call(
        _imm3d_fused_kernel,
        out_shape=out_shapes,
        grid_spec=pltpu.PrefetchScalarGridSpec(
            num_scalar_prefetch=0,
            grid=grid,
            in_specs=[
                pl.BlockSpec((tile, NZ_PAD), lambda i: (i, 0)),     # feat tile
                pl.BlockSpec((NZ_PAD, W_TOTAL), lambda i: (0, 0)),  # packed W (bf16)
                pl.BlockSpec((1, W_TOTAL), lambda i: (0, 0)),       # packed bias
            ],
            out_specs=(
                pl.BlockSpec((tile, W_PRED), lambda i: (i, 0)),
                pl.BlockSpec((tile, W_SYM), lambda i: (i, 0)),
                pl.BlockSpec((tile, W_CAM), lambda i: (i, 0)),
            )),
        compiler_params=pltpu.CompilerParams(
            dimension_semantics=("parallel",)),
    )(feat_p, w_all, b_all)

    def unslab(s):  # (b_pad, 3*128) coordinate-major -> (B, n_kp, 3) torch layout
        return s[:B].reshape(B, N_COORD, KPAD)[:, :, :n_kp].transpose(0, 2, 1)

    pred_v = unslab(pred_s)
    delta_v = pred_v - mean_v                      # computed in wrapper (opt #6)
    sym_all = unslab(sym_s)
    lm_sym = sym_all[..., :2]                      # ce(pred_v[..., :2], flip=True)
    z_sym = sym_all[..., 2:3]                      # ce(pred_v[..., 2:3], flip=False)
    cam_pred = cam_s[:B, :7]
    scale_pred = cam_pred[:, 0:1]
    trans_pred = cam_pred[:, 1:3]
    quat_pred = cam_pred[:, 3:7]
    return (delta_v, pred_v, scale_pred, trans_pred, quat_pred,
            cam_pred, lm_sym, z_sym)


# --------------------------------------------------------------------------
# Host-side constant / parameter packing (numpy, built once)
# --------------------------------------------------------------------------
def build_map68():
    m = {}
    m.update({i: 16 - i for i in range(17)})
    m.update({i: 43 - i for i in range(17, 27)})
    m.update({i: i for i in range(27, 31)})
    m.update({i: 66 - i for i in range(31, 36)})
    m.update({i: 81 - i for i in range(36, 40)})
    m.update({i: 87 - i for i in range(40, 42)})
    m.update({i: 81 - i for i in range(42, 46)})
    m.update({i: 87 - i for i in range(46, 48)})
    m.update({i: 102 - i for i in range(48, 55)})
    m.update({i: 114 - i for i in range(55, 60)})
    m.update({i: 124 - i for i in range(60, 65)})
    m.update({i: 132 - i for i in range(65, 68)})
    return m


def build_ensym_matrix(n_kp=68):
    m = build_map68()
    mat = np.zeros((n_kp, n_kp), np.float32)
    for k, v in m.items():
        mat[k, v] = 1.0
    return mat


def pack_params(w_shape, b_shape, w_scale, b_scale, w_trans, b_trans,
                w_quat, b_quat, mean_v, n_kp, nz_feat):
    """Pack torch-layout head params into one lane-aligned (128, 896) weight.

    Layout (lanes):
      [0,384)   pred slab  : pred_v[b,k,c] at lane 128*c + k  (bias += mean_v)
      [384,768) sym slab   : coordEnsymmicer folded; x block negated, bias'=1-(..)
      [768,896) cam block  : scale | trans | quat | zeros     (scale bias += 1)
    """
    w_shape = np.asarray(w_shape, np.float32); b_shape = np.asarray(b_shape, np.float32)
    w_scale = np.asarray(w_scale, np.float32); b_scale = np.asarray(b_scale, np.float32)
    w_trans = np.asarray(w_trans, np.float32); b_trans = np.asarray(b_trans, np.float32)
    w_quat = np.asarray(w_quat, np.float32); b_quat = np.asarray(b_quat, np.float32)
    mean_v = np.asarray(mean_v, np.float32)

    w_all = np.zeros((NZ_PAD, W_TOTAL), np.float32)
    b_all = np.zeros((W_TOTAL,), np.float32)
    k = np.arange(n_kp)

    # --- pred slab: pred = mean_v + shape_head(feat) -------------------------
    for c in range(N_COORD):
        w_all[:nz_feat, KPAD * c + k] = w_shape[:, 3 * k + c]
        b_all[KPAD * c + k] = b_shape[3 * k + c] + mean_v[0, :, c]

    # --- sym slab: coordEnsymmicer + flip folded into (W, b) -----------------
    m = build_map68()
    perm = np.array([m[i] for i in range(n_kp)], np.int64)   # sym[k] = pred[perm[k]]
    # x block (flip=True): sym_x[k] = 1 - pred_x[perm[k]]
    w_all[:nz_feat, W_PRED + 0 * KPAD + k] = -w_shape[:, 3 * perm + 0]
    b_all[W_PRED + 0 * KPAD + k] = 1.0 - (b_shape[3 * perm + 0] + mean_v[0, perm, 0])
    # y / z blocks (no flip): sym_c[k] = pred_c[perm[k]]
    for c in (1, 2):
        w_all[:nz_feat, W_PRED + c * KPAD + k] = w_shape[:, 3 * perm + c]
        b_all[W_PRED + c * KPAD + k] = b_shape[3 * perm + c] + mean_v[0, perm, c]
    # NOTE: padding lanes (k >= n_kp) of every block keep weight=0 AND bias=0,
    # so the raw slabs never carry garbage (review correctness concern).

    # --- cam block -----------------------------------------------------------
    cam0 = W_PRED + W_SYM
    w_all[:nz_feat, cam0:cam0 + 1] = w_scale
    w_all[:nz_feat, cam0 + 1:cam0 + 3] = w_trans
    w_all[:nz_feat, cam0 + 3:cam0 + 7] = w_quat
    b_all[cam0] = b_scale[0] + 1.0            # ScalePredictor's +1 folded here
    b_all[cam0 + 1:cam0 + 3] = b_trans
    b_all[cam0 + 3:cam0 + 7] = b_quat

    # bf16 weights halve constant HBM traffic; accumulation stays f32 (MXU
    # default precision decomposes f32 to bf16 anyway, so accuracy unchanged).
    return (jnp.asarray(w_all, jnp.bfloat16),
            jnp.asarray(b_all, jnp.float32)[None, :])


# --------------------------------------------------------------------------
# Pure-JAX reference (torch semantics) for correctness checking
# --------------------------------------------------------------------------
def reference(feat, w_shape, b_shape, w_scale, b_scale, w_trans, b_trans,
              w_quat, b_quat, mean_v, ensym_mat, n_kp):
    B = feat.shape[0]
    delta_v = (feat @ w_shape + b_shape).reshape(B, n_kp, 3)
    pred_v = mean_v + delta_v
    scale = jnp.maximum(feat @ w_scale + b_scale + 1.0, 0.0) + 1e-12
    trans = feat @ w_trans + b_trans
    q = feat @ w_quat + b_quat
    qn = jnp.sqrt(jnp.sum(q * q, axis=1, keepdims=True))
    quat = q / jnp.maximum(qn, 1e-12)
    cam = jnp.concatenate([scale, trans, quat], axis=1)
    lm_sym = jnp.einsum('kj,bjc->bkc', ensym_mat, pred_v[..., :2])
    lm_sym = lm_sym.at[:, :, 0].set(1.0 - lm_sym[:, :, 0])
    z_sym = jnp.einsum('kj,bjc->bkc', ensym_mat, pred_v[..., 2:3])
    return delta_v, pred_v, scale, trans, quat, cam, lm_sym, z_sym


# --------------------------------------------------------------------------
# Driver
# --------------------------------------------------------------------------
if __name__ == "__main__":
    B, nz_feat, n_kp = 2, 32, 68

    key = jax.random.PRNGKey(0)
    (k_feat, k_mv, k_ws, k_bs, k_wsc, k_bsc,
     k_wt, k_bt, k_wq, k_bq) = jax.random.split(key, 10)

    bound = 1.0 / (nz_feat ** 0.5)
    # ShapePredictor: weight ~ N(0, 1e-4), bias default Linear init
    w_shape = 1e-4 * jax.random.normal(k_ws, (nz_feat, 3 * n_kp), jnp.float32)
    b_shape = jax.random.uniform(k_bs, (3 * n_kp,), jnp.float32, -bound, bound)
    # Scale / Trans / Quat heads: default Linear init
    w_scale = jax.random.uniform(k_wsc, (nz_feat, 1), jnp.float32, -bound, bound)
    b_scale = jax.random.uniform(k_bsc, (1,), jnp.float32, -bound, bound)
    w_trans = jax.random.uniform(k_wt, (nz_feat, 2), jnp.float32, -bound, bound)
    b_trans = jax.random.uniform(k_bt, (2,), jnp.float32, -bound, bound)
    w_quat = jax.random.uniform(k_wq, (nz_feat, 4), jnp.float32, -bound, bound)
    b_quat = jax.random.uniform(k_bq, (4,), jnp.float32, -bound, bound)

    # mean_v ~ torch.rand(1, n_kp, 3)
    mean_v = jax.random.uniform(k_mv, (1, n_kp, 3), jnp.float32)

    # feature code produced by the (not reproduced) Encoder
    feat = jax.random.normal(k_feat, (B, nz_feat), jnp.float32)

    # Pack all heads + folded coordEnsymmicer into one lane-aligned weight.
    w_all, b_all = pack_params(
        w_shape, b_shape, w_scale, b_scale, w_trans, b_trans,
        w_quat, b_quat, mean_v, n_kp, nz_feat)

    outs = imm3d_heads(feat, w_all, b_all, mean_v, n_kp)
    jax.block_until_ready(outs)
    (delta_v, pred_v, scale_pred, trans_pred, quat_pred,
     cam_pred, lm_sym, z_sym) = outs

    assert delta_v.shape == (B, n_kp, 3)
    assert pred_v.shape == (B, n_kp, 3)
    assert scale_pred.shape == (B, 1)
    assert trans_pred.shape == (B, 2)
    assert quat_pred.shape == (B, 4)
    assert cam_pred.shape == (B, 7)
    assert lm_sym.shape == (B, n_kp, 2)
    assert z_sym.shape == (B, n_kp, 1)

    # Correctness vs pure-JAX reference (loose tolerance: bf16 weights + MXU
    # default precision, same as the original fused kernel's error budget).
    ensym_mat = jnp.asarray(build_ensym_matrix(n_kp))
    refs = reference(feat, w_shape, b_shape, w_scale, b_scale, w_trans, b_trans,
                     w_quat, b_quat, mean_v, ensym_mat, n_kp)
    names = ("delta_v", "pred_v", "scale", "trans", "quat", "cam", "lm_sym", "z_sym")
    for name, got, want in zip(names, outs, refs):
        ok = bool(jnp.allclose(got, want, atol=3e-2, rtol=3e-2))
        assert ok, f"mismatch in {name}"

    # vis_sym of an all-ones visibility vector is identically ones (permutation
    # of ones) — constant-folded here instead of computed in-kernel.
    vis_sym = jnp.ones((B, n_kp, 1), jnp.float32)
    assert vis_sym.shape == (B, n_kp, 1)

    print("KERNEL_OK")
</pallas_src>

<mosaic_0001>
module attributes {stable_mosaic.version = 11 : i64} {
  func.func @_imm3d_fused_kernel(%arg0: i32, %arg1: memref<8x128xf32, #tpu.memory_space<vmem>>, %arg2: memref<128x896xbf16, #tpu.memory_space<vmem>>, %arg3: memref<1x896xf32, #tpu.memory_space<vmem>>, %arg4: memref<8x384xf32, #tpu.memory_space<vmem>>, %arg5: memref<8x384xf32, #tpu.memory_space<vmem>>, %arg6: memref<8x128xf32, #tpu.memory_space<vmem>>) attributes {dimension_semantics = [#tpu.dimension_semantics<parallel>], iteration_bounds = array<i64: 1>, scalar_prefetch = 0 : i64, scratch_operands = 0 : i64, tpu.core_type = #tpu.core_type<tc>, window_params = [{transform_indices = @transform_0, window_bounds = array<i64: 8, 128>}, {pipeline_mode = #tpu.pipeline_mode<synchronous>, transform_indices = @transform_1, window_bounds = array<i64: 128, 896>}, {pipeline_mode = #tpu.pipeline_mode<synchronous>, transform_indices = @transform_2, window_bounds = array<i64: 1, 896>}, {transform_indices = @transform_3, window_bounds = array<i64: 8, 384>}, {transform_indices = @transform_4, window_bounds = array<i64: 8, 384>}, {transform_indices = @transform_5, window_bounds = array<i64: 8, 128>}]} {
    %c0 = arith.constant 0 : index
    %c0_0 = arith.constant 0 : index
    %0 = vector.load %arg1[%c0, %c0_0] : memref<8x128xf32, #tpu.memory_space<vmem>>, vector<8x128xf32>
    %1 = arith.truncf %0 : vector<8x128xf32> to vector<8x128xbf16>
    %c0_1 = arith.constant 0 : index
    %c0_2 = arith.constant 0 : index
    %2 = vector.load %arg2[%c0_1, %c0_2] : memref<128x896xbf16, #tpu.memory_space<vmem>>, vector<128x896xbf16>
    %cst = arith.constant dense<0.000000e+00> : vector<8x896xf32>
    %3 = tpu.matmul %1, %2, %cst {dimension_numbers = #tpu.dot_dimension_numbers<[1], [0], [0], [1], [0, 0, 1, 1], [], []>} : vector<8x128xbf16>, vector<128x896xbf16>, vector<8x896xf32> -> vector<8x896xf32>
    %c0_3 = arith.constant 0 : index
    %c0_4 = arith.constant 0 : index
    %4 = vector.load %arg3[%c0_3, %c0_4] : memref<1x896xf32, #tpu.memory_space<vmem>>, vector<1x896xf32>
    %5 = vector.broadcast %4 : vector<1x896xf32> to vector<8x896xf32>
    %6 = arith.addf %3, %5 : vector<8x896xf32>
    %7 = vector.extract_strided_slice %6 {offsets = [0, 0], sizes = [8, 384], strides = [1, 1]} : vector<8x896xf32> to vector<8x384xf32>
    %c0_5 = arith.constant 0 : index
    %c0_6 = arith.constant 0 : index
    %8 = vector.load %arg4[%c0_5, %c0_6] : memref<8x384xf32, #tpu.memory_space<vmem>>, vector<8x384xf32>
    tpu.vector_store %arg4[%c0_5, %c0_6], %7 {strides = array<i32>} : memref<8x384xf32, #tpu.memory_space<vmem>>, vector<8x384xf32>,
    %9 = vector.extract_strided_slice %6 {offsets = [0, 384], sizes = [8, 384], strides = [1, 1]} : vector<8x896xf32> to vector<8x384xf32>
    %c0_7 = arith.constant 0 : index
    %c0_8 = arith.constant 0 : index
    %10 = vector.load %arg5[%c0_7, %c0_8] : memref<8x384xf32, #tpu.memory_space<vmem>>, vector<8x384xf32>
    tpu.vector_store %arg5[%c0_7, %c0_8], %9 {strides = array<i32>} : memref<8x384xf32, #tpu.memory_space<vmem>>, vector<8x384xf32>,
    %11 = vector.extract_strided_slice %6 {offsets = [0, 768], sizes = [8, 128], strides = [1, 1]} : vector<8x896xf32> to vector<8x128xf32>
    %12 = tpu.iota {dimensions = array<i32: 1>} : vector<8x128xi32>
    %cst_9 = arith.constant 0.000000e+00 : f32
    %13 = vector.broadcast %cst_9 : f32 to vector<8x128xf32>
    %14 = arith.maximumf %11, %13 : vector<8x128xf32>
    %cst_10 = arith.constant 9.99999996E-13 : f32
    %15 = vector.broadcast %cst_10 : f32 to vector<8x128xf32>
    %16 = arith.addf %14, %15 : vector<8x128xf32>
    %c3_i32 = arith.constant 3 : i32
    %17 = vector.broadcast %c3_i32 : i32 to vector<8x128xi32>
    %18 = arith.cmpi sge, %12, %17 : vector<8x128xi32>
    %c7_i32 = arith.constant 7 : i32
    %19 = vector.broadcast %c7_i32 : i32 to vector<8x128xi32>
    %20 = arith.cmpi slt, %12, %19 : vector<8x128xi32>
    %21 = arith.andi %18, %20 : vector<8x128xi1>
    %22 = arith.mulf %11, %11 : vector<8x128xf32>
    %cst_11 = arith.constant 0.000000e+00 : f32
    %23 = vector.broadcast %cst_11 : f32 to vector<8x128xf32>
    %24 = arith.select %21, %22, %23 : vector<8x128xi1>, vector<8x128xf32>
    %cst_12 = arith.constant dense<0.000000e+00> : vector<8xf32>
    %25 = vector.multi_reduction <add>, %24, %cst_12 [1] : vector<8x128xf32> to vector<8xf32>
    %26 = vector.shape_cast %25 : vector<8xf32> to vector<8x1xf32>
    %27 = math.rsqrt %26 : vector<8x1xf32>
    %cst_13 = arith.constant 9.99999995E+11 : f32
    %28 = vector.broadcast %cst_13 : f32 to vector<8x1xf32>
    %29 = arith.minimumf %27, %28 : vector<8x1xf32>
    %30 = vector.broadcast %29 : vector<8x1xf32> to vector<8x128xf32>
    %31 = arith.mulf %11, %30 : vector<8x128xf32>
    %c0_i32 = arith.constant 0 : i32
    %32 = vector.broadcast %c0_i32 : i32 to vector<8x128xi32>
    %33 = arith.cmpi eq, %12, %32 : vector<8x128xi32>
    %34 = arith.select %21, %31, %11 : vector<8x128xi1>, vector<8x128xf32>
    %35 = arith.select %33, %16, %34 : vector<8x128xi1>, vector<8x128xf32>
    %c0_14 = arith.constant 0 : index
    %c0_15 = arith.constant 0 : index
    %36 = vector.load %arg6[%c0_14, %c0_15] : memref<8x128xf32, #tpu.memory_space<vmem>>, vector<8x128xf32>
    tpu.vector_store %arg6[%c0_14, %c0_15], %35 {strides = array<i32>} : memref<8x128xf32, #tpu.memory_space<vmem>>, vector<8x128xf32>,
    return
  }
  func.func @transform_0(%arg0: i32) -> (i32, i32) {
    %c0_i32 = arith.constant 0 : i32
    %c0_i32_0 = arith.constant 0 : i32
    return %arg0, %c0_i32 : i32, i32
  }
  func.func @transform_1(%arg0: i32) -> (i32, i32) {
    %c0_i32 = arith.constant 0 : i32
    %c0_i32_0 = arith.constant 0 : i32
    %c0_i32_1 = arith.constant 0 : i32
    return %c0_i32, %c0_i32_0 : i32, i32
  }
  func.func @transform_2(%arg0: i32) -> (i32, i32) {
    %c0_i32 = arith.constant 0 : i32
    %c0_i32_0 = arith.constant 0 : i32
    %c0_i32_1 = arith.constant 0 : i32
    return %c0_i32, %c0_i32_0 : i32, i32
  }
  func.func @transform_3(%arg0: i32) -> (i32, i32) {
    %c0_i32 = arith.constant 0 : i32
    %c0_i32_0 = arith.constant 0 : i32
    return %arg0, %c0_i32 : i32, i32
  }
  func.func @transform_4(%arg0: i32) -> (i32, i32) {
    %c0_i32 = arith.constant 0 : i32
    %c0_i32_0 = arith.constant 0 : i32
    return %arg0, %c0_i32 : i32, i32
  }
  func.func @transform_5(%arg0: i32) -> (i32, i32) {
    %c0_i32 = arith.constant 0 : i32
    %c0_i32_0 = arith.constant 0 : i32
    return %arg0, %c0_i32 : i32, i32
  }
}

</mosaic_0001>

<llo_original>
// kernel: tpu_custom_call.1
$region0: #{tpu_custom_call.1}
  #allocation0 [shape = 'u32[]', space=smem, size = 0x4, offset = 0x4, fixed_abs, tag = 'smem constant byte address 0x4 - core index']
  #allocation1 [shape = 'u32[144,128]{1,0:T(1,128)}', space=vmem, size = 0x12000, scoped, tag = 'internal scratch']
  %s0 = inlined_call_operand.hbm [shape: f32[8,128], index: 0, kind: input, shape index: {}]
  %s1 = inlined_call_operand.hbm [shape: bf16[128,896], index: 1, kind: input, shape index: {}]
  %s2 = inlined_call_operand.hbm [shape: f32[1,896], index: 2, kind: input, shape index: {}]
  %s3 = inlined_call_operand.hbm [shape: f32[8,384], index: 3, kind: output, shape index: {0}]
  %s4 = inlined_call_operand.hbm [shape: f32[8,384], index: 4, kind: output, shape index: {1}]
  %s5 = inlined_call_operand.hbm [shape: f32[8,128], index: 5, kind: output, shape index: {2}]
  %6 = xla_tuple %s3, %s4, %s5
  %s7 = sld [smem:[#allocation0]]
  $region50: #{tpu_custom_call.1} parent=0
    _
  %s9 = ssub.s32 1, %s7
  %s10 = scalar_select 0, %s9, %s7
  $region1: #{tpu_custom_call.1} parent=0
    #allocation2 [shape = 'u8[4096]{0}', space=vmem, size = 0x1000, scoped, tag = 'input window, operand 0, single buffered']
    #allocation3 [shape = 's32[1]{0}', space=sflag, size = 0x4, scoped, tag = 'scoped memory for tpu_custom_call.1']
    #allocation4 [shape = 's32[1]{0}', space=sflag, size = 0x4, scoped, tag = 'scoped memory for tpu_custom_call.1']
    #allocation5 [shape = 'u8[229376]{0}', space=vmem, size = 0x38000, scoped, tag = 'input window, operand 1, single buffered']
    #allocation6 [shape = 's32[1]{0}', space=sflag, size = 0x4, scoped, tag = 'scoped memory for tpu_custom_call.1']
    #allocation7 [shape = 'u8[3584]{0}', space=vmem, size = 0x1000, scoped, tag = 'input window, operand 2, single buffered']
    #allocation8 [shape = 'u8[12288]{0}', space=vmem, size = 0x3000, scoped, tag = 'output window, operand 0, single buffered']
    #allocation9 [shape = 'u8[12288]{0}', space=vmem, size = 0x3000, scoped, tag = 'output window, operand 1, single buffered']
    #allocation10 [shape = 's32[1]{0}', space=sflag, size = 0x4, scoped, tag = 'scoped memory for tpu_custom_call.1']
    #allocation11 [shape = 'u8[4096]{0}', space=vmem, size = 0x1000, scoped, tag = 'output window, operand 2, single buffered']
    %11 = vsyncpa [#allocation3], 0
    %12 = vsyncpa [#allocation6], 0
    %13 = vsyncpa [#allocation4], 0
    %14 = vsyncpa [#allocation10], 0
    // Predicated region
    $region2: #{tpu_custom_call.1} parent=1 // pred_check
      _
    $region3: #{tpu_custom_call.1} parent=1 // pred_check_branch
      %16 = sbr.rel (0) target = $region5
    $region4: #{tpu_custom_call.1} parent=1 // pred_region
      %s18 = ssub.s32 128, 128
      %19 = vsyncadd [#allocation3], %s18
      %s21 = sshll.u32 [#allocation2], 4
      %s22 = int_to_ptr.vmem [resolvable:$true] %s21
      %24 = dma.hbm_to_vmem [thread:$0]  %s0, 128, %s22, [#allocation3]
    $region5: #{tpu_custom_call.1} parent=1 // pred_fallthru
      _
    // Predicated region
    $region6: #{tpu_custom_call.1} parent=1 // pred_check
      _
    $region7: #{tpu_custom_call.1} parent=1 // pred_check_branch
      %26 = sbr.rel (0) target = $region9
    $region8: #{tpu_custom_call.1} parent=1 // pred_region
      %s28 = ssub.s32 7168, 7168
      %29 = vsyncadd [#allocation6], %s28
      %s30 = sshll.u32 [#allocation5], 4
      %s31 = int_to_ptr.vmem [resolvable:$true] %s30
      %36 = dma.hbm_to_vmem [thread:$0]  %s1, 7168, %s31, [#allocation6], 448, 448, 28
    $region9: #{tpu_custom_call.1} parent=1 // pred_fallthru
      _
    // Predicated region
    $region10: #{tpu_custom_call.1} parent=1 // pred_check
      _
    $region11: #{tpu_custom_call.1} parent=1 // pred_check_branch
      %38 = sbr.rel (0) target = $region13
    $region12: #{tpu_custom_call.1} parent=1 // pred_region
      %s40 = ssub.s32 112, 112
      %41 = vsyncadd [#allocation6], %s40
      %s43 = sshll.u32 [#allocation7], 4
      %s44 = int_to_ptr.vmem [resolvable:$true] %s43
      %46 = dma.hbm_to_vmem [thread:$0]  %s2, 112, %s44, [#allocation6]
    $region13: #{tpu_custom_call.1} parent=1 // pred_fallthru
      _
    // Predicated region
    $region14: #{tpu_custom_call.1} parent=1 // pred_check
      _
    $region15: #{tpu_custom_call.1} parent=1 // pred_check_branch
      %48 = sbr.rel (0) target = $region17
    $region16: #{tpu_custom_call.1} parent=1 // pred_region
      %49 = dma.done [#allocation3], 128
    $region17: #{tpu_custom_call.1} parent=1 // pred_fallthru
      _
    // Predicated region
    $region18: #{tpu_custom_call.1} parent=1 // pred_check
      _
    $region19: #{tpu_custom_call.1} parent=1 // pred_check_branch
      %51 = sbr.rel (0) target = $region21
    $region20: #{tpu_custom_call.1} parent=1 // pred_region
      %52 = dma.done [#allocation6], 7168
    $region21: #{tpu_custom_call.1} parent=1 // pred_fallthru
      _
    // Predicated region
    $region22: #{tpu_custom_call.1} parent=1 // pred_check
      _
    $region23: #{tpu_custom_call.1} parent=1 // pred_check_branch
      %54 = sbr.rel (0) target = $region25
    $region24: #{tpu_custom_call.1} parent=1 // pred_region
      %55 = dma.done [#allocation6], 112
    $region25: #{tpu_custom_call.1} parent=1 // pred_fallthru
      _
    %v57 = vld [vmem:[#allocation2] sm:$0xff]
    %v58 = vpack.c.bf16 %v57, %v57
    %v59 = vld [vmem:[#allocation5] sm:$0xff]
    %v60 = vld [vmem:[#allocation5 + $0x8] sm:$0xff]
    %v61 = vld [vmem:[#allocation5 + $0x10] sm:$0xff]
    %v62 = vld [vmem:[#allocation5 + $0x18] sm:$0xf]
    %v63 = vld [vmem:[#allocation5 + $0x1c] sm:$0xff]
    %v64 = vld [vmem:[#allocation5 + $0x24] sm:$0xff]
    %v65 = vld [vmem:[#allocation5 + $0x2c] sm:$0xff]
    %v66 = vld [vmem:[#allocation5 + $0x34] sm:$0xf]
    %v67 = vld [vmem:[#allocation5 + $0x38] sm:$0xff]
    %v68 = vld [vmem:[#allocation5 + $0x40] sm:$0xff]
    %v69 = vld [vmem:[#allocation5 + $0x48] sm:$0xff]
    %v70 = vld [vmem:[#allocation5 + $0x50] sm:$0xf]
    %v71 = vld [vmem:[#allocation5 + $0x54] sm:$0xff]
    %v72 = vld [vmem:[#allocation5 + $0x5c] sm:$0xff]
    %v73 = vld [vmem:[#allocation5 + $0x64] sm:$0xff]
    %v74 = vld [vmem:[#allocation5 + $0x6c] sm:$0xf]
    %v75 = vld [vmem:[#allocation5 + $0x70] sm:$0xff]
    %v76 = vld [vmem:[#allocation5 + $0x78] sm:$0xff]
    %v77 = vld [vmem:[#allocation5 + $0x80] sm:$0xff]
    %v78 = vld [vmem:[#allocation5 + $0x88] sm:$0xf]
    %v79 = vld [vmem:[#allocation5 + $0x8c] sm:$0xff]
    %v80 = vld [vmem:[#allocation5 + $0x94] sm:$0xff]
    %v81 = vld [vmem:[#allocation5 + $0x9c] sm:$0xff]
    %v82 = vld [vmem:[#allocation5 + $0xa4] sm:$0xf]
    %v83 = vld [vmem:[#allocation5 + $0xa8] sm:$0xff]
    %v84 = vld [vmem:[#allocation5 + $0xb0] sm:$0xff]
    %v85 = vld [vmem:[#allocation5 + $0xb8] sm:$0xff]
    %v86 = vld [vmem:[#allocation5 + $0xc0] sm:$0xf]
    %v87 = vld [vmem:[#allocation5 + $0xc4] sm:$0xff]
    %v88 = vld [vmem:[#allocation5 + $0xcc] sm:$0xff]
    %v89 = vld [vmem:[#allocation5 + $0xd4] sm:$0xff]
    %v90 = vld [vmem:[#allocation5 + $0xdc] sm:$0xf]
    %v91 = vld [vmem:[#allocation5 + $0xe0] sm:$0xff]
    %v92 = vld [vmem:[#allocation5 + $0xe8] sm:$0xff]
    %v93 = vld [vmem:[#allocation5 + $0xf0] sm:$0xff]
    %v94 = vld [vmem:[#allocation5 + $0xf8] sm:$0xf]
    %v95 = vld [vmem:[#allocation5 + $0xfc] sm:$0xff]
    %v96 = vld [vmem:[#allocation5 + $0x104] sm:$0xff]
    %v97 = vld [vmem:[#allocation5 + $0x10c] sm:$0xff]
    %v98 = vld [vmem:[#allocation5 + $0x114] sm:$0xf]
    %v99 = vld [vmem:[#allocation5 + $0x118] sm:$0xff]
    %v100 = vld [vmem:[#allocation5 + $0x120] sm:$0xff]
    %v101 = vld [vmem:[#allocation5 + $0x128] sm:$0xff]
    %v102 = vld [vmem:[#allocation5 + $0x130] sm:$0xf]
    %v103 = vld [vmem:[#allocation5 + $0x134] sm:$0xff]
    %v104 = vld [vmem:[#allocation5 + $0x13c] sm:$0xff]
    %v105 = vld [vmem:[#allocation5 + $0x144] sm:$0xff]
    %v106 = vld [vmem:[#allocation5 + $0x14c] sm:$0xf]
    %v107 = vld [vmem:[#allocation5 + $0x150] sm:$0xff]
    %v108 = vld [vmem:[#allocation5 + $0x158] sm:$0xff]
    %v109 = vld [vmem:[#allocation5 + $0x160] sm:$0xff]
    %v110 = vld [vmem:[#allocation5 + $0x168] sm:$0xf]
    %v111 = vld [vmem:[#allocation5 + $0x16c] sm:$0xff]
    %v112 = vld [vmem:[#allocation5 + $0x174] sm:$0xff]
    %v113 = vld [vmem:[#allocation5 + $0x17c] sm:$0xff]
    %v114 = vld [vmem:[#allocation5 + $0x184] sm:$0xf]
    %v115 = vld [vmem:[#allocation5 + $0x188] sm:$0xff]
    %v116 = vld [vmem:[#allocation5 + $0x190] sm:$0xff]
    %v117 = vld [vmem:[#allocation5 + $0x198] sm:$0xff]
    %v118 = vld [vmem:[#allocation5 + $0x1a0] sm:$0xf]
    %v119 = vld [vmem:[#allocation5 + $0x1a4] sm:$0xff]
    %v120 = vld [vmem:[#allocation5 + $0x1ac] sm:$0xff]
    %v121 = vld [vmem:[#allocation5 + $0x1b4] sm:$0xff]
    %v122 = vld [vmem:[#allocation5 + $0x1bc] sm:$0xf]
    %v123 = vld [vmem:[#allocation7] sm:$0xff]
    %v125 = vlaneseq
    %v126 = vshrl.u32 %v125, 7
    %v127 = vsub.s32 0, %v126
    %v128 = vrot.slane %v123, %v127
    %v129 = vlaneseq
    %v130 = vshrl.u32 %v129, 7
    %v131 = vsub.s32 1, %v130
    %v132 = vrot.slane %v123, %v131
    %v133 = vlaneseq
    %v134 = vshrl.u32 %v133, 7
    %v135 = vsub.s32 2, %v134
    %v136 = vrot.slane %v123, %v135
    %v137 = vlaneseq
    %v138 = vshrl.u32 %v137, 7
    %v139 = vsub.s32 3, %v138
    %v140 = vrot.slane %v123, %v139
    %v141 = vlaneseq
    %v142 = vshrl.u32 %v141, 7
    %v143 = vsub.s32 4, %v142
    %v144 = vrot.slane %v123, %v143
    %v145 = vlaneseq
    %v146 = vshrl.u32 %v145, 7
    %v147 = vsub.s32 5, %v146
    %v148 = vrot.slane %v123, %v147
    %v149 = vlaneseq
    %v150 = vshrl.u32 %v149, 7
    %v151 = vsub.s32 6, %v150
    %v152 = vrot.slane %v123, %v151
    %v224 = vunpack.c.l.b16 %v59
    %v225 = vunpack.c.h.b16 %v59
    %v226 = vunpack.c.l.b16 %v60
    %v227 = vunpack.c.h.b16 %v60
    %v228 = vunpack.c.l.b16 %v61
    %v229 = vunpack.c.h.b16 %v61
    %v230 = vunpack.c.l.b16 %v62
    %v231 = vunpack.c.l.b16 %v63
    %v232 = vunpack.c.h.b16 %v63
    %v233 = vunpack.c.l.b16 %v64
    %v234 = vunpack.c.h.b16 %v64
    %v235 = vunpack.c.l.b16 %v65
    %v236 = vunpack.c.h.b16 %v65
    %v237 = vunpack.c.l.b16 %v66
    %v238 = vunpack.c.l.b16 %v67
    %v239 = vunpack.c.h.b16 %v67
    %v240 = vunpack.c.l.b16 %v68
    %v241 = vunpack.c.h.b16 %v68
    %v242 = vunpack.c.l.b16 %v69
    %v243 = vunpack.c.h.b16 %v69
    %v244 = vunpack.c.l.b16 %v70
    %v245 = vunpack.c.l.b16 %v71
    %v246 = vunpack.c.h.b16 %v71
    %v247 = vunpack.c.l.b16 %v72
    %v248 = vunpack.c.h.b16 %v72
    %v249 = vunpack.c.l.b16 %v73
    %v250 = vunpack.c.h.b16 %v73
    %v251 = vunpack.c.l.b16 %v74
    %v252 = vunpack.c.l.b16 %v75
    %v253 = vunpack.c.h.b16 %v75
    %v254 = vunpack.c.l.b16 %v76
    %v255 = vunpack.c.h.b16 %v76
    %v256 = vunpack.c.l.b16 %v77
    %v257 = vunpack.c.h.b16 %v77
    %v258 = vunpack.c.l.b16 %v78
    %v259 = vunpack.c.l.b16 %v79
    %v260 = vunpack.c.h.b16 %v79
    %v261 = vunpack.c.l.b16 %v80
    %v262 = vunpack.c.h.b16 %v80
    %v263 = vunpack.c.l.b16 %v81
    %v264 = vunpack.c.h.b16 %v81
    %v265 = vunpack.c.l.b16 %v82
    %v266 = vunpack.c.l.b16 %v83
    %v267 = vunpack.c.h.b16 %v83
    %v268 = vunpack.c.l.b16 %v84
    %v269 = vunpack.c.h.b16 %v84
    %v270 = vunpack.c.l.b16 %v85
    %v271 = vunpack.c.h.b16 %v85
    %v272 = vunpack.c.l.b16 %v86
    %v273 = vunpack.c.l.b16 %v87
    %v274 = vunpack.c.h.b16 %v87
    %v275 = vunpack.c.l.b16 %v88
    %v276 = vunpack.c.h.b16 %v88
    %v277 = vunpack.c.l.b16 %v89
    %v278 = vunpack.c.h.b16 %v89
    %v279 = vunpack.c.l.b16 %v90
    %v280 = vunpack.c.l.b16 %v91
    %v281 = vunpack.c.h.b16 %v91
    %v282 = vunpack.c.l.b16 %v92
    %v283 = vunpack.c.h.b16 %v92
    %v284 = vunpack.c.l.b16 %v93
    %v285 = vunpack.c.h.b16 %v93
    %v286 = vunpack.c.l.b16 %v94
    %v287 = vunpack.c.l.b16 %v95
    %v288 = vunpack.c.h.b16 %v95
    %v289 = vunpack.c.l.b16 %v96
    %v290 = vunpack.c.h.b16 %v96
    %v291 = vunpack.c.l.b16 %v97
    %v292 = vunpack.c.h.b16 %v97
    %v293 = vunpack.c.l.b16 %v98
    %v294 = vunpack.c.l.b16 %v99
    %v295 = vunpack.c.h.b16 %v99
    %v296 = vunpack.c.l.b16 %v100
    %v297 = vunpack.c.h.b16 %v100
    %v298 = vunpack.c.l.b16 %v101
    %v299 = vunpack.c.h.b16 %v101
    %v300 = vunpack.c.l.b16 %v102
    %v301 = vunpack.c.l.b16 %v103
    %v302 = vunpack.c.h.b16 %v103
    %v303 = vunpack.c.l.b16 %v104
    %v304 = vunpack.c.h.b16 %v104
    %v305 = vunpack.c.l.b16 %v105
    %v306 = vunpack.c.h.b16 %v105
    %v307 = vunpack.c.l.b16 %v106
    %v308 = vunpack.c.l.b16 %v107
    %v309 = vunpack.c.h.b16 %v107
    %v310 = vunpack.c.l.b16 %v108
    %v311 = vunpack.c.h.b16 %v108
    %v312 = vunpack.c.l.b16 %v109
    %v313 = vunpack.c.h.b16 %v109
    %v314 = vunpack.c.l.b16 %v110
    %v315 = vunpack.c.l.b16 %v111
    %v316 = vunpack.c.h.b16 %v111
    %v317 = vunpack.c.l.b16 %v112
    %v318 = vunpack.c.h.b16 %v112
    %v319 = vunpack.c.l.b16 %v113
    %v320 = vunpack.c.h.b16 %v113
    %v321 = vunpack.c.l.b16 %v114
    %v322 = vunpack.c.l.b16 %v115
    %v323 = vunpack.c.h.b16 %v115
    %v324 = vunpack.c.l.b16 %v116
    %v325 = vunpack.c.h.b16 %v116
    %v326 = vunpack.c.l.b16 %v117
    %v327 = vunpack.c.h.b16 %v117
    %v328 = vunpack.c.l.b16 %v118
    %v329 = vunpack.c.l.b16 %v119
    %v330 = vunpack.c.h.b16 %v119
    %v331 = vunpack.c.l.b16 %v120
    %v332 = vunpack.c.h.b16 %v120
    %v333 = vunpack.c.l.b16 %v121
    %v334 = vunpack.c.h.b16 %v121
    %v335 = vunpack.c.l.b16 %v122
    %v336 = vpack.c.b16 %v231, %v224
    %v337 = vpack.c.b16 %v232, %v225
    %v338 = vpack.c.b16 %v233, %v226
    %v339 = vpack.c.b16 %v234, %v227
    %v340 = vpack.c.b16 %v235, %v228
    %v341 = vpack.c.b16 %v236, %v229
    %v342 = vpack.c.b16 %v237, %v230
    %v343 = vpack.c.b16 %v245, %v238
    %v344 = vpack.c.b16 %v246, %v239
    %v345 = vpack.c.b16 %v247, %v240
    %v346 = vpack.c.b16 %v248, %v241
    %v347 = vpack.c.b16 %v249, %v242
    %v348 = vpack.c.b16 %v250, %v243
    %v349 = vpack.c.b16 %v251, %v244
    %v350 = vpack.c.b16 %v259, %v252
    %v351 = vpack.c.b16 %v260, %v253
    %v352 = vpack.c.b16 %v261, %v254
    %v353 = vpack.c.b16 %v262, %v255
    %v354 = vpack.c.b16 %v263, %v256
    %v355 = vpack.c.b16 %v264, %v257
    %v356 = vpack.c.b16 %v265, %v258
    %v357 = vpack.c.b16 %v273, %v266
    %v358 = vpack.c.b16 %v274, %v267
    %v359 = vpack.c.b16 %v275, %v268
    %v360 = vpack.c.b16 %v276, %v269
    %v361 = vpack.c.b16 %v277, %v270
    %v362 = vpack.c.b16 %v278, %v271
    %v363 = vpack.c.b16 %v279, %v272
    %v364 = vpack.c.b16 %v287, %v280
    %v365 = vpack.c.b16 %v288, %v281
    %v366 = vpack.c.b16 %v289, %v282
    %v367 = vpack.c.b16 %v290, %v283
    %v368 = vpack.c.b16 %v291, %v284
    %v369 = vpack.c.b16 %v292, %v285
    %v370 = vpack.c.b16 %v293, %v286
    %v371 = vpack.c.b16 %v301, %v294
    %v372 = vpack.c.b16 %v302, %v295
    %v373 = vpack.c.b16 %v303, %v296
    %v374 = vpack.c.b16 %v304, %v297
    %v375 = vpack.c.b16 %v305, %v298
    %v376 = vpack.c.b16 %v306, %v299
    %v377 = vpack.c.b16 %v307, %v300
    %v378 = vpack.c.b16 %v315, %v308
    %v379 = vpack.c.b16 %v316, %v309
    %v380 = vpack.c.b16 %v317, %v310
    %v381 = vpack.c.b16 %v318, %v311
    %v382 = vpack.c.b16 %v319, %v312
    %v383 = vpack.c.b16 %v320, %v313
    %v384 = vpack.c.b16 %v321, %v314
    %v385 = vpack.c.b16 %v329, %v322
    %v386 = vpack.c.b16 %v330, %v323
    %v387 = vpack.c.b16 %v331, %v324
    %v388 = vpack.c.b16 %v332, %v325
    %v389 = vpack.c.b16 %v333, %v326
    %v390 = vpack.c.b16 %v334, %v327
    %v391 = vpack.c.b16 %v335, %v328
    %448 = vmatprep.subr.bf16.mxu0 %v386
    %449 = vmatpush1.bf16.msra.mxu0 %v385
    %450 = vmatprep.subr.bf16.mxu0 %v379
    %451 = vmatpush1.bf16.msra.mxu0 %v378
    %452 = vmatprep.subr.bf16.mxu0 %v372
    %453 = vmatpush1.bf16.msra.mxu0 %v371
    %454 = vmatprep.subr.bf16.mxu0 %v365
    %455 = vmatpush1.bf16.msra.mxu0 %v364
    %456 = vmatprep.subr.bf16.mxu0 %v358
    %457 = vmatpush1.bf16.msra.mxu0 %v357
    %458 = vmatprep.subr.bf16.mxu0 %v351
    %459 = vmatpush1.bf16.msra.mxu0 %v350
    %460 = vmatprep.subr.bf16.mxu0 %v344
    %461 = vmatpush1.bf16.msra.mxu0 %v343
    %462 = vmatprep.subr.bf16.mxu0 %v337
    %463 = vmatpush1.bf16.msra.mxu0 %v336
    %464 = vmatprep.subr.bf16.mxu0 0
    %465 = vmatpush2.bf16.msra.mxu0 0
    %466 = vmatprep.subr.bf16.mxu0 0
    %467 = vmatpush2.bf16.msra.mxu0 0
    %468 = vmatprep.subr.bf16.mxu0 0
    %469 = vmatpush2.bf16.msra.mxu0 0
    %470 = vmatprep.subr.bf16.mxu0 0
    %471 = vmatpush2.bf16.msra.mxu0 0
    %472 = vmatprep.subr.bf16.mxu0 0
    %473 = vmatpush2.bf16.msra.mxu0 0
    %474 = vmatprep.subr.bf16.mxu0 0
    %475 = vmatpush2.bf16.msra.mxu0 0
    %476 = vmatprep.subr.bf16.mxu0 0
    %477 = vmatpush2.bf16.msra.mxu0 0
    %478 = vmatprep.subr.bf16.mxu0 0
    %479 = vmatpush2.bf16.msra.mxu0 0
    %480 = vmatprep.mubr.bf16.mxu0 0
    %481 = vmatmul.mubr.bf16.gmra.mxu0 %v58
    %v482 = vpop.f32.mrf.mxu0
    %v483 = vadd.f32 %v128, %v482
    %v484 = vpop.f32.mrf.mxu0
    %v485 = vadd.f32 %v132, %v484
    %v486 = vpop.f32.mrf.mxu0
    %v487 = vpop.f32.mrf.mxu0
    %488 = vdwg.mxu0
    %489 = vmatprep.subr.bf16.mxu0 %v388
    %490 = vmatpush1.bf16.msra.mxu0 %v387
    %491 = vmatprep.subr.bf16.mxu0 %v381
    %492 = vmatpush1.bf16.msra.mxu0 %v380
    %493 = vmatprep.subr.bf16.mxu0 %v374
    %494 = vmatpush1.bf16.msra.mxu0 %v373
    %495 = vmatprep.subr.bf16.mxu0 %v367
    %496 = vmatpush1.bf16.msra.mxu0 %v366
    %497 = vmatprep.subr.bf16.mxu0 %v360
    %498 = vmatpush1.bf16.msra.mxu0 %v359
    %499 = vmatprep.subr.bf16.mxu0 %v353
    %500 = vmatpush1.bf16.msra.mxu0 %v352
    %501 = vmatprep.subr.bf16.mxu0 %v346
    %502 = vmatpush1.bf16.msra.mxu0 %v345
    %503 = vmatprep.subr.bf16.mxu0 %v339
    %504 = vmatpush1.bf16.msra.mxu0 %v338
    %505 = vmatprep.subr.bf16.mxu0 0
    %506 = vmatpush2.bf16.msra.mxu0 0
    %507 = vmatprep.subr.bf16.mxu0 0
    %508 = vmatpush2.bf16.msra.mxu0 0
    %509 = vmatprep.subr.bf16.mxu0 0
    %510 = vmatpush2.bf16.msra.mxu0 0
    %511 = vmatprep.subr.bf16.mxu0 0
    %512 = vmatpush2.bf16.msra.mxu0 0
    %513 = vmatprep.subr.bf16.mxu0 0
    %514 = vmatpush2.bf16.msra.mxu0 0
    %515 = vmatprep.subr.bf16.mxu0 0
    %516 = vmatpush2.bf16.msra.mxu0 0
    %517 = vmatprep.subr.bf16.mxu0 0
    %518 = vmatpush2.bf16.msra.mxu0 0
    %519 = vmatprep.subr.bf16.mxu0 0
    %520 = vmatpush2.bf16.msra.mxu0 0
    %521 = vmatprep.mubr.bf16.mxu0 0
    %522 = vmatmul.mubr.bf16.gmra.mxu0 %v58
    %v523 = vpop.f32.mrf.mxu0
    %v524 = vadd.f32 %v136, %v523
    %v525 = vpop.f32.mrf.mxu0
    %v526 = vadd.f32 %v140, %v525
    %v527 = vpop.f32.mrf.mxu0
    %v528 = vpop.f32.mrf.mxu0
    %529 = vdwg.mxu0
    %530 = vmatprep.subr.bf16.mxu0 %v390
    %531 = vmatpush1.bf16.msra.mxu0 %v389
    %532 = vmatprep.subr.bf16.mxu0 %v383
    %533 = vmatpush1.bf16.msra.mxu0 %v382
    %534 = vmatprep.subr.bf16.mxu0 %v376
    %535 = vmatpush1.bf16.msra.mxu0 %v375
    %536 = vmatprep.subr.bf16.mxu0 %v369
    %537 = vmatpush1.bf16.msra.mxu0 %v368
    %538 = vmatprep.subr.bf16.mxu0 %v362
    %539 = vmatpush1.bf16.msra.mxu0 %v361
    %540 = vmatprep.subr.bf16.mxu0 %v355
    %541 = vmatpush1.bf16.msra.mxu0 %v354
    %542 = vmatprep.subr.bf16.mxu0 %v348
    %543 = vmatpush1.bf16.msra.mxu0 %v347
    %544 = vmatprep.subr.bf16.mxu0 %v341
    %545 = vmatpush1.bf16.msra.mxu0 %v340
    %546 = vmatprep.subr.bf16.mxu0 0
    %547 = vmatpush2.bf16.msra.mxu0 0
    %548 = vmatprep.subr.bf16.mxu0 0
    %549 = vmatpush2.bf16.msra.mxu0 0
    %550 = vmatprep.subr.bf16.mxu0 0
    %551 = vmatpush2.bf16.msra.mxu0 0
    %552 = vmatprep.subr.bf16.mxu0 0
    %553 = vmatpush2.bf16.msra.mxu0 0
    %554 = vmatprep.subr.bf16.mxu0 0
    %555 = vmatpush2.bf16.msra.mxu0 0
    %556 = vmatprep.subr.bf16.mxu0 0
    %557 = vmatpush2.bf16.msra.mxu0 0
    %558 = vmatprep.subr.bf16.mxu0 0
    %559 = vmatpush2.bf16.msra.mxu0 0
    %560 = vmatprep.subr.bf16.mxu0 0
    %561 = vmatpush2.bf16.msra.mxu0 0
    %562 = vmatprep.mubr.bf16.mxu0 0
    %563 = vmatmul.mubr.bf16.gmra.mxu0 %v58
    %v564 = vpop.f32.mrf.mxu0
    %v565 = vadd.f32 %v144, %v564
    %v566 = vpop.f32.mrf.mxu0
    %v567 = vadd.f32 %v148, %v566
    %v568 = vpop.f32.mrf.mxu0
    %v569 = vpop.f32.mrf.mxu0
    %570 = vdwg.mxu0
    %571 = vmatprep.subr.bf16.mxu0 0
    %572 = vmatpush1.bf16.msra.mxu0 %v391
    %573 = vmatprep.subr.bf16.mxu0 0
    %574 = vmatpush1.bf16.msra.mxu0 %v384
    %575 = vmatprep.subr.bf16.mxu0 0
    %576 = vmatpush1.bf16.msra.mxu0 %v377
    %577 = vmatprep.subr.bf16.mxu0 0
    %578 = vmatpush1.bf16.msra.mxu0 %v370
    %579 = vmatprep.subr.bf16.mxu0 0
    %580 = vmatpush1.bf16.msra.mxu0 %v363
    %581 = vmatprep.subr.bf16.mxu0 0
    %582 = vmatpush1.bf16.msra.mxu0 %v356
    %583 = vmatprep.subr.bf16.mxu0 0
    %584 = vmatpush1.bf16.msra.mxu0 %v349
    %585 = vmatprep.subr.bf16.mxu0 0
    %586 = vmatpush1.bf16.msra.mxu0 %v342
    %587 = vmatprep.subr.bf16.mxu0 0
    %588 = vmatpush2.bf16.msra.mxu0 0
    %589 = vmatprep.subr.bf16.mxu0 0
    %590 = vmatpush2.bf16.msra.mxu0 0
    %591 = vmatprep.subr.bf16.mxu0 0
    %592 = vmatpush2.bf16.msra.mxu0 0
    %593 = vmatprep.subr.bf16.mxu0 0
    %594 = vmatpush2.bf16.msra.mxu0 0
    %595 = vmatprep.subr.bf16.mxu0 0
    %596 = vmatpush2.bf16.msra.mxu0 0
    %597 = vmatprep.subr.bf16.mxu0 0
    %598 = vmatpush2.bf16.msra.mxu0 0
    %599 = vmatprep.subr.bf16.mxu0 0
    %600 = vmatpush2.bf16.msra.mxu0 0
    %601 = vmatprep.subr.bf16.mxu0 0
    %602 = vmatpush2.bf16.msra.mxu0 0
    %603 = vmatprep.mubr.bf16.mxu0 0
    %604 = vmatmul.mubr.bf16.gmra.mxu0 %v58
    %v605 = vpop.f32.mrf.mxu0
    %v606 = vadd.f32 %v152, %v605
    %v607 = vpop.f32.mrf.mxu0
    %v608 = vpop.f32.mrf.mxu0
    %v609 = vpop.f32.mrf.mxu0
    %610 = vdwg.mxu0
    %611 = vst [vmem:[#allocation8] sm:$0xff] %v483
    %612 = vst [vmem:[#allocation8 + $0x8] sm:$0xff] %v485
    %613 = vst [vmem:[#allocation8 + $0x10] sm:$0xff] %v524
    %614 = vst [vmem:[#allocation9] sm:$0xff] %v526
    %615 = vst [vmem:[#allocation9 + $0x8] sm:$0xff] %v565
    %616 = vst [vmem:[#allocation9 + $0x10] sm:$0xff] %v567
    %v617 = vlaneseq
    %v618 = vand.u32 %v617, 127
    %v619 = vmax.f32 %v606, 0.0
    %v620 = vadd.f32 %v619, 1e-12
    %vm621 = vcmp.ge.s32.totalorder %v618, 3
    %vm622 = vcmp.lt.s32.totalorder %v618, 7
    %vm623 = vmand %vm621, %vm622
    %v624 = vmul.f32 %v606, %v606
    %v625 = vsel %vm623, %v624, 0.0
    %626 = vadd.xlane.f32.xlu0 %v625
    %v627 = vpop.xlane.xlu0 %626
    %v628 = vrsqrt.pop %v627
    %v629 = vmin.f32 %v628, 1e+12
    %v630 = vmul.f32 %v606, %v629
    %vm631 = vcmp.eq.s32.totalorder %v618, 0
    %v632 = vsel %vm623, %v630, %v606
    %v633 = vsel %vm631, %v620, %v632
    %634 = vst [vmem:[#allocation11] sm:$0xff] %v633
    // Predicated region
    $region26: #{tpu_custom_call.1} parent=1 // pred_check
      _
    $region27: #{tpu_custom_call.1} parent=1 // pred_check_branch
      %636 = sbr.rel (0) target = $region29
    $region28: #{tpu_custom_call.1} parent=1 // pred_region
      %s638 = ssub.s32 384, 384
      %639 = vsyncadd [#allocation4], %s638
      %s641 = sshll.u32 [#allocation8], 4
      %s642 = int_to_ptr.vmem [resolvable:$true] %s641
      %644 = dma.vmem_to_hbm [thread:$0]  %s642, 384, %s3, [#allocation4]
    $region29: #{tpu_custom_call.1} parent=1 // pred_fallthru
      _
    // Predicated region
    $region30: #{tpu_custom_call.1} parent=1 // pred_check
      _
    $region31: #{tpu_custom_call.1} parent=1 // pred_check_branch
      %646 = sbr.rel (0) target = $region33
    $region32: #{tpu_custom_call.1} parent=1 // pred_region
      %s648 = ssub.s32 384, 384
      %649 = vsyncadd [#allocation10], %s648
      %s651 = sshll.u32 [#allocation9], 4
      %s652 = int_to_ptr.vmem [resolvable:$true] %s651
      %654 = dma.vmem_to_hbm [thread:$0]  %s652, 384, %s4, [#allocation10]
    $region33: #{tpu_custom_call.1} parent=1 // pred_fallthru
      _
    // Predicated region
    $region34: #{tpu_custom_call.1} parent=1 // pred_check
      _
    $region35: #{tpu_custom_call.1} parent=1 // pred_check_branch
      %656 = sbr.rel (0) target = $region37
    $region36: #{tpu_custom_call.1} parent=1 // pred_region
      %s658 = ssub.s32 128, 128
      %659 = vsyncadd [#allocation10], %s658
      %s661 = sshll.u32 [#allocation11], 4
      %s662 = int_to_ptr.vmem [resolvable:$true] %s661
      %664 = dma.vmem_to_hbm [thread:$0]  %s662, 128, %s5, [#allocation10]
    $region37: #{tpu_custom_call.1} parent=1 // pred_fallthru
      _
    // Predicated region
    $region38: #{tpu_custom_call.1} parent=1 // pred_check
      _
    $region39: #{tpu_custom_call.1} parent=1 // pred_check_branch
      %666 = sbr.rel (0) target = $region41
    $region40: #{tpu_custom_call.1} parent=1 // pred_region
      %667 = dma.done [#allocation4], 384
    $region41: #{tpu_custom_call.1} parent=1 // pred_fallthru
      _
    // Predicated region
    $region42: #{tpu_custom_call.1} parent=1 // pred_check
      _
    $region43: #{tpu_custom_call.1} parent=1 // pred_check_branch
      %669 = sbr.rel (0) target = $region45
    $region44: #{tpu_custom_call.1} parent=1 // pred_region
      %670 = dma.done [#allocation10], 384
    $region45: #{tpu_custom_call.1} parent=1 // pred_fallthru
      _
    // Predicated region
    $region46: #{tpu_custom_call.1} parent=1 // pred_check
      _
    $region47: #{tpu_custom_call.1} parent=1 // pred_check_branch
      %672 = sbr.rel (0) target = $region49
    $region48: #{tpu_custom_call.1} parent=1 // pred_region
      %673 = dma.done [#allocation10], 128
    $region49: #{tpu_custom_call.1} parent=1 // pred_fallthru
      _
    %674 = vsyncpa [#allocation3], 1
    %675 = vsyncpa [#allocation6], 1
    %676 = vsyncpa [#allocation4], 1
    %677 = vsyncpa [#allocation10], 1

</llo_original>
